<compile_context>
chip_gen: v7x
topology: tpu7x:2x2x1
jax: 0.10.0
libtpu: 0.0.40
codegen_flags: <defaults>
</compile_context>

<pallas_src>
import jax
import jax.numpy as jnp
from jax import lax
from jax.experimental import pallas as pl
from jax.experimental.pallas import tpu as pltpu


_VMEM_LIMIT_BYTES = 32 * 1024 * 1024     # safe on v5e/v6e (128 MiB) and v7x (64 MiB)
_BLOCK_BUDGET_BYTES = 12 * 1024 * 1024   # target for the double-buffered block set


def _pick_col_tile(cols, n_rows, itemsize):
    """Lane (column) tile for the GEMM paths.

    Prefers 256-aligned divisors of `cols` (v6e/v7x MXU width), then
    128-aligned ones; caps the double-buffered x+out block footprint to
    _BLOCK_BUDGET_BYTES so the kernel also fits v7x's smaller VMEM.
    """
    if cols <= 256:
        return cols                      # single block == full dim (allowed)
    cap = _BLOCK_BUDGET_BYTES // max(1, 4 * n_rows * itemsize)
    cap = max(256, min(2048, cap))
    cap = (cap // 128) * 128
    if cols <= cap:
        return cols                      # block equals full array dim
    for align in (256, 128):
        t = (cap // align) * align
        while t >= align:
            if cols % t == 0:
                return t
            t -= align
    # No aligned divisor: 128-aligned non-divisible tile.  The padded columns
    # of the boundary block are not in the contracted dimension, and Pallas
    # masks out-of-bounds output writes, so this stays correct.
    return cap


def _pick_t_block(t_len, n, c, a_itemsize, x_itemsize):
    """Largest divisor of T whose double-buffered block set fits the budget."""
    per_t = 2 * (n * n * a_itemsize + 2 * c * n * x_itemsize)
    cap = max(1, _BLOCK_BUDGET_BYTES // max(1, per_t))
    best = 1
    for d in range(1, t_len + 1):
        if t_len % d == 0 and d <= cap:
            best = d
    return best


# ---------------------------------------------------------------------------
# Kernels
# ---------------------------------------------------------------------------

def _nconv_a2d_kernel(a_ref, x_ref, o_ref):
    # a_ref: (N, N) resident; x_ref: (N, tile); o_ref: (N, tile)
    o_ref[...] = jnp.dot(
        a_ref[...], x_ref[...], preferred_element_type=jnp.float32
    ).astype(o_ref.dtype)


def _nconv_a3d_kernel(a_ref, x_ref, o_ref):
    # a_ref: (1, N, N) resident per batch; x_ref: (1, N, tile); o_ref: (1, N, tile)
    o_ref[0] = jnp.dot(
        a_ref[0], x_ref[0], preferred_element_type=jnp.float32
    ).astype(o_ref.dtype)


def _nconv_a4d_kernel(a_ref, x_ref, o_ref):
    # a_ref: (Tblk, 1, N, N); x_ref: (1, Tblk, C, N); o_ref: (1, Tblk, C, N)
    # Per timestep:  Y[c, v] = sum_w X[c, w] * A[v, w]   (lane dim = N)
    tblk = a_ref.shape[0]
    for t in range(tblk):   # static unroll; Tblk is a compile-time constant
        o_ref[0, t] = lax.dot_general(
            x_ref[0, t],
            a_ref[t, 0],
            dimension_numbers=(((1,), (1,)), ((), ())),
            preferred_element_type=jnp.float32,
        ).astype(o_ref.dtype)


# ---------------------------------------------------------------------------
# Wrapper
# ---------------------------------------------------------------------------

def nconv(x, A):
    """x: [B, C, N, T]; A: [N,N] | [B,N,N] | [T,B,N,N] -> [B, C, N, T]."""
    B, C, N, T = x.shape
    x_item = x.dtype.itemsize
    a_item = A.dtype.itemsize

    if A.ndim == 2:
        # One big GEMM: A[N,N] @ X[N, B*C*T], column-tiled grid, A resident.
        cols = B * C * T
        x_r = jnp.transpose(x, (2, 0, 1, 3)).reshape(N, cols)
        tile = _pick_col_tile(cols, N, x_item)
        n_col = pl.cdiv(cols, tile)

        out = pl.pallas_call(
            _nconv_a2d_kernel,
            out_shape=jax.ShapeDtypeStruct((N, cols), x.dtype),
            grid_spec=pltpu.PrefetchScalarGridSpec(
                num_scalar_prefetch=0,
                grid=(n_col,),
                in_specs=[
                    pl.BlockSpec((N, N), lambda j: (0, 0)),        # resident
                    pl.BlockSpec((N, tile), lambda j: (0, j)),
                ],
                out_specs=pl.BlockSpec((N, tile), lambda j: (0, j)),
            ),
            compiler_params=pltpu.CompilerParams(
                dimension_semantics=("parallel",),
                vmem_limit_bytes=_VMEM_LIMIT_BYTES,
            ),
            cost_estimate=pl.CostEstimate(
                flops=2 * N * N * cols,
                transcendentals=0,
                bytes_accessed=2 * N * cols * x_item + N * N * a_item,
            ),
        )(A, x_r)
        # [N, B, C, T] -> [B, C, N, T]
        return jnp.transpose(out.reshape(N, B, C, T), (1, 2, 0, 3))

    elif A.ndim == 3:
        # Per-batch GEMM: A[b][N,N] @ X[b][N, C*T]; column-tiled inner axis
        # keeps A resident and bounds the VMEM working set.
        cols = C * T
        x_r = jnp.transpose(x, (0, 2, 1, 3)).reshape(B, N, cols)
        tile = _pick_col_tile(cols, N, x_item)
        n_col = pl.cdiv(cols, tile)

        out = pl.pallas_call(
            _nconv_a3d_kernel,
            out_shape=jax.ShapeDtypeStruct((B, N, cols), x.dtype),
            grid_spec=pltpu.PrefetchScalarGridSpec(
                num_scalar_prefetch=0,
                grid=(B, n_col),
                in_specs=[
                    pl.BlockSpec((1, N, N), lambda b, j: (b, 0, 0)),   # resident per b
                    pl.BlockSpec((1, N, tile), lambda b, j: (b, 0, j)),
                ],
                out_specs=pl.BlockSpec((1, N, tile), lambda b, j: (b, 0, j)),
            ),
            compiler_params=pltpu.CompilerParams(
                dimension_semantics=("parallel", "parallel"),
                vmem_limit_bytes=_VMEM_LIMIT_BYTES,
            ),
            cost_estimate=pl.CostEstimate(
                flops=2 * B * N * N * cols,
                transcendentals=0,
                bytes_accessed=2 * B * N * cols * x_item + B * N * N * a_item,
            ),
        )(A, x_r)
        # [B, N, C, T] -> [B, C, N, T]
        return jnp.transpose(out.reshape(B, N, C, T), (0, 2, 1, 3))

    elif A.ndim == 4:
        # Per-timestep adjacency.  Block Tblk timesteps per grid step and flip
        # the matmul so the output lane dim is N (lane-dense), not C.
        x_r = jnp.transpose(x, (0, 3, 1, 2))     # [B, T, C, N]
        tblk = _pick_t_block(T, N, C, a_item, x_item)
        n_t = T // tblk

        out = pl.pallas_call(
            _nconv_a4d_kernel,
            out_shape=jax.ShapeDtypeStruct((B, T, C, N), x.dtype),
            grid_spec=pltpu.PrefetchScalarGridSpec(
                num_scalar_prefetch=0,
                grid=(B, n_t),
                in_specs=[
                    pl.BlockSpec((tblk, 1, N, N), lambda b, tt: (tt, b, 0, 0)),
                    pl.BlockSpec((1, tblk, C, N), lambda b, tt: (b, tt, 0, 0)),
                ],
                out_specs=pl.BlockSpec((1, tblk, C, N), lambda b, tt: (b, tt, 0, 0)),
            ),
            compiler_params=pltpu.CompilerParams(
                dimension_semantics=("parallel", "parallel"),
                vmem_limit_bytes=_VMEM_LIMIT_BYTES,
            ),
            cost_estimate=pl.CostEstimate(
                flops=2 * B * T * N * N * C,
                transcendentals=0,
                bytes_accessed=2 * B * T * C * N * x_item + T * B * N * N * a_item,
            ),
        )(A, x_r)
        # [B, T, C, N] -> [B, C, N, T]
        return jnp.transpose(out, (0, 2, 3, 1))

    else:
        raise ValueError(f"Unsupported adjacency rank: {A.ndim}")


if __name__ == "__main__":
    B, C, N, T = 2, 4, 16, 8  # x: [B, D, N, T]
    key = jax.random.PRNGKey(0)
    kx, k2, k3, k4 = jax.random.split(key, 4)

    x = jax.random.normal(kx, (B, C, N, T), dtype=jnp.float32)
    A2 = jax.random.normal(k2, (N, N), dtype=jnp.float32)
    A3 = jax.random.normal(k3, (B, N, N), dtype=jnp.float32)
    A4 = jax.random.normal(k4, (T, B, N, N), dtype=jnp.float32)

    out2 = jax.block_until_ready(nconv(x, A2))
    out3 = jax.block_until_ready(nconv(x, A3))
    out4 = jax.block_until_ready(nconv(x, A4))

    ref2 = jnp.einsum("bcwt,vw->bcvt", x, A2)
    ref3 = jnp.einsum("bcwt,bvw->bcvt", x, A3)
    ref4 = jnp.einsum("bcwt,tbvw->bcvt", x, A4)

    assert out2.shape == (B, C, N, T) and out2.dtype == x.dtype
    assert out3.shape == (B, C, N, T) and out3.dtype == x.dtype
    assert out4.shape == (B, C, N, T) and out4.dtype == x.dtype
    assert jnp.allclose(out2, ref2, rtol=1e-5, atol=1e-5)
    assert jnp.allclose(out3, ref3, rtol=1e-5, atol=1e-5)
    assert jnp.allclose(out4, ref4, rtol=1e-5, atol=1e-5)

    print("KERNEL_OK")
</pallas_src>

<mosaic_0001>
module attributes {stable_mosaic.version = 11 : i64} {
  func.func @_nconv_a2d_kernel(%arg0: i32, %arg1: memref<16x16xf32, #tpu.memory_space<vmem>>, %arg2: memref<16x64xf32, #tpu.memory_space<vmem>>, %arg3: memref<16x64xf32, #tpu.memory_space<vmem>>) attributes {dimension_semantics = [#tpu.dimension_semantics<parallel>], iteration_bounds = array<i64: 1>, scalar_prefetch = 0 : i64, scratch_operands = 0 : i64, tpu.core_type = #tpu.core_type<tc>, window_params = [{pipeline_mode = #tpu.pipeline_mode<synchronous>, transform_indices = @transform_0, window_bounds = array<i64: 16, 16>}, {transform_indices = @transform_1, window_bounds = array<i64: 16, 64>}, {transform_indices = @transform_2, window_bounds = array<i64: 16, 64>}]} {
    %c0 = arith.constant 0 : index
    %c0_0 = arith.constant 0 : index
    %0 = vector.load %arg1[%c0, %c0_0] : memref<16x16xf32, #tpu.memory_space<vmem>>, vector<16x16xf32>
    %c0_1 = arith.constant 0 : index
    %c0_2 = arith.constant 0 : index
    %1 = vector.load %arg2[%c0_1, %c0_2] : memref<16x64xf32, #tpu.memory_space<vmem>>, vector<16x64xf32>
    %cst = arith.constant dense<0.000000e+00> : vector<16x64xf32>
    %2 = tpu.matmul %0, %1, %cst {dimension_numbers = #tpu.dot_dimension_numbers<[1], [0], [0], [1], [0, 0, 1, 1], [], []>} : vector<16x16xf32>, vector<16x64xf32>, vector<16x64xf32> -> vector<16x64xf32>
    %c0_3 = arith.constant 0 : index
    %c0_4 = arith.constant 0 : index
    %3 = vector.load %arg3[%c0_3, %c0_4] : memref<16x64xf32, #tpu.memory_space<vmem>>, vector<16x64xf32>
    tpu.vector_store %arg3[%c0_3, %c0_4], %2 {strides = array<i32>} : memref<16x64xf32, #tpu.memory_space<vmem>>, vector<16x64xf32>,
    return
  }
  func.func @transform_0(%arg0: i32) -> (i32, i32) {
    %c0_i32 = arith.constant 0 : i32
    %c0_i32_0 = arith.constant 0 : i32
    %c0_i32_1 = arith.constant 0 : i32
    return %c0_i32, %c0_i32_0 : i32, i32
  }
  func.func @transform_1(%arg0: i32) -> (i32, i32) {
    %c0_i32 = arith.constant 0 : i32
    %c0_i32_0 = arith.constant 0 : i32
    return %c0_i32, %arg0 : i32, i32
  }
  func.func @transform_2(%arg0: i32) -> (i32, i32) {
    %c0_i32 = arith.constant 0 : i32
    %c0_i32_0 = arith.constant 0 : i32
    return %c0_i32, %arg0 : i32, i32
  }
}

</mosaic_0001>

<llo_original>
// kernel: tpu_custom_call.1
$region0: #{tpu_custom_call.1}
  #allocation0 [shape = 'u32[]', space=smem, size = 0x4, offset = 0x4, fixed_abs, tag = 'smem constant byte address 0x4 - core index']
  #allocation1 [shape = 'u32[144,128]{1,0:T(1,128)}', space=vmem, size = 0x12000, scoped, tag = 'internal scratch']
  %s0 = inlined_call_operand.hbm [shape: f32[16,16], index: 0, kind: input, shape index: {}]
  %s1 = inlined_call_operand.hbm [shape: f32[16,64], index: 1, kind: input, shape index: {}]
  %s2 = inlined_call_operand.hbm [shape: f32[16,64], index: 2, kind: output, shape index: {}]
  %s3 = sld [smem:[#allocation0]]
  $region26: #{tpu_custom_call.1} parent=0
    _
  %s5 = ssub.s32 1, %s3
  %s6 = scalar_select 0, %s5, %s3
  $region1: #{tpu_custom_call.1} parent=0
    #allocation2 [shape = 'u8[8192]{0}', space=vmem, size = 0x2000, scoped, tag = 'input window, operand 0, single buffered']
    #allocation3 [shape = 's32[1]{0}', space=sflag, size = 0x4, scoped, tag = 'scoped memory for tpu_custom_call.1']
    #allocation4 [shape = 's32[1]{0}', space=sflag, size = 0x4, scoped, tag = 'scoped memory for tpu_custom_call.1']
    #allocation5 [shape = 'u8[8192]{0}', space=vmem, size = 0x2000, scoped, tag = 'input window, operand 1, single buffered']
    #allocation6 [shape = 's32[1]{0}', space=sflag, size = 0x4, scoped, tag = 'scoped memory for tpu_custom_call.1']
    #allocation7 [shape = 'u8[8192]{0}', space=vmem, size = 0x2000, scoped, tag = 'output window, operand 0, single buffered']
    %7 = vsyncpa [#allocation3], 0
    %8 = vsyncpa [#allocation6], 0
    %9 = vsyncpa [#allocation4], 0
    // Predicated region
    $region2: #{tpu_custom_call.1} parent=1 // pred_check
      _
    $region3: #{tpu_custom_call.1} parent=1 // pred_check_branch
      %11 = sbr.rel (0) target = $region5
    $region4: #{tpu_custom_call.1} parent=1 // pred_region
      %s13 = ssub.s32 256, 256
      %14 = vsyncadd [#allocation3], %s13
      %s15 = sshll.u32 [#allocation2], 4
      %s16 = int_to_ptr.vmem [resolvable:$true] %s15
      %21 = dma.hbm_to_vmem [thread:$0]  %s0, 256, %s16, [#allocation3], 128, 128, 8
    $region5: #{tpu_custom_call.1} parent=1 // pred_fallthru
      _
    // Predicated region
    $region6: #{tpu_custom_call.1} parent=1 // pred_check
      _
    $region7: #{tpu_custom_call.1} parent=1 // pred_check_branch
      %23 = sbr.rel (0) target = $region9
    $region8: #{tpu_custom_call.1} parent=1 // pred_region
      %s25 = ssub.s32 256, 256
      %26 = vsyncadd [#allocation6], %s25
      %s27 = sshll.u32 [#allocation5], 4
      %s28 = int_to_ptr.vmem [resolvable:$true] %s27
      %33 = dma.hbm_to_vmem [thread:$0]  %s1, 256, %s28, [#allocation6], 128, 128, 8
    $region9: #{tpu_custom_call.1} parent=1 // pred_fallthru
      _
    // Predicated region
    $region10: #{tpu_custom_call.1} parent=1 // pred_check
      _
    $region11: #{tpu_custom_call.1} parent=1 // pred_check_branch
      %35 = sbr.rel (0) target = $region13
    $region12: #{tpu_custom_call.1} parent=1 // pred_region
      %36 = dma.done [#allocation3], 256
    $region13: #{tpu_custom_call.1} parent=1 // pred_fallthru
      _
    // Predicated region
    $region14: #{tpu_custom_call.1} parent=1 // pred_check
      _
    $region15: #{tpu_custom_call.1} parent=1 // pred_check_branch
      %38 = sbr.rel (0) target = $region17
    $region16: #{tpu_custom_call.1} parent=1 // pred_region
      %39 = dma.done [#allocation6], 256
    $region17: #{tpu_custom_call.1} parent=1 // pred_fallthru
      _
    %v40 = vld [vmem:[#allocation2] sm:$0xff]
    %v41 = vld [vmem:[#allocation2 + $0x8] sm:$0xff]
    %v42 = vld [vmem:[#allocation5] sm:$0xff]
    %v43 = vld [vmem:[#allocation5 + $0x8] sm:$0xff]
    %vm44 = vcmask 130048
    %v46 = vsel %vm44, %v40, 0
    %v49 = vsel %vm44, %v41, 0
    %51 = vmatprep.subr.mxu0 0.0
    %52 = vmatpush1.msra.mxu0 %v42
    %53 = vmatprep.subr.mxu0 0.0
    %54 = vmatpush1.msra.mxu0 %v43
    %55 = vmatprep.subr.mxu0 0.0
    %56 = vmatpush1.msra.mxu0 0.0
    %57 = vmatprep.subr.mxu0 0.0
    %58 = vmatpush1.msra.mxu0 0.0
    %59 = vmatprep.subr.mxu0 0.0
    %60 = vmatpush1.msra.mxu0 0.0
    %61 = vmatprep.subr.mxu0 0.0
    %62 = vmatpush1.msra.mxu0 0.0
    %63 = vmatprep.subr.mxu0 0.0
    %64 = vmatpush1.msra.mxu0 0.0
    %65 = vmatprep.subr.mxu0 0.0
    %66 = vmatpush1.msra.mxu0 0.0
    %67 = vmatprep.subr.mxu0 0.0
    %68 = vmatpush1.msra.mxu0 0.0
    %69 = vmatprep.subr.mxu0 0.0
    %70 = vmatpush1.msra.mxu0 0.0
    %71 = vmatprep.subr.mxu0 0.0
    %72 = vmatpush1.msra.mxu0 0.0
    %73 = vmatprep.subr.mxu0 0.0
    %74 = vmatpush1.msra.mxu0 0.0
    %75 = vmatprep.subr.mxu0 0.0
    %76 = vmatpush1.msra.mxu0 0.0
    %77 = vmatprep.subr.mxu0 0.0
    %78 = vmatpush1.msra.mxu0 0.0
    %79 = vmatprep.subr.mxu0 0.0
    %80 = vmatpush1.msra.mxu0 0.0
    %81 = vmatprep.subr.mxu0 0.0
    %82 = vmatpush1.msra.mxu0 0.0
    %83 = vmatprep.subr.mxu0 0.0
    %84 = vmatpush1.msra.mxu0 0.0
    %85 = vmatprep.subr.mxu0 0.0
    %86 = vmatpush1.msra.mxu0 0.0
    %87 = vmatprep.subr.mxu0 0.0
    %88 = vmatpush1.msra.mxu0 0.0
    %89 = vmatprep.subr.mxu0 0.0
    %90 = vmatpush1.msra.mxu0 0.0
    %91 = vmatprep.subr.mxu0 0.0
    %92 = vmatpush1.msra.mxu0 0.0
    %93 = vmatprep.subr.mxu0 0.0
    %94 = vmatpush1.msra.mxu0 0.0
    %95 = vmatprep.subr.mxu0 0.0
    %96 = vmatpush1.msra.mxu0 0.0
    %97 = vmatprep.subr.mxu0 0.0
    %98 = vmatpush1.msra.mxu0 0.0
    %99 = vmatprep.subr.mxu0 0.0
    %100 = vmatpush1.msra.mxu0 0.0
    %101 = vmatprep.subr.mxu0 0.0
    %102 = vmatpush1.msra.mxu0 0.0
    %103 = vmatprep.subr.mxu0 0.0
    %104 = vmatpush1.msra.mxu0 0.0
    %105 = vmatprep.subr.mxu0 0.0
    %106 = vmatpush1.msra.mxu0 0.0
    %107 = vmatprep.subr.mxu0 0.0
    %108 = vmatpush1.msra.mxu0 0.0
    %109 = vmatprep.subr.mxu0 0.0
    %110 = vmatpush1.msra.mxu0 0.0
    %111 = vmatprep.subr.mxu0 0.0
    %112 = vmatpush1.msra.mxu0 0.0
    %113 = vmatprep.subr.mxu0 0.0
    %114 = vmatpush1.msra.mxu0 0.0
    %115 = vmatprep.mubr.f32.mxu0 0.0
    %116 = vmatmul.mubr.f32.gmra.mrb[0].mxu0 %v46
    %v117 = vpop.f32.mrb[0].mxu0
    %v118 = vadd.f32 0.0, %v117
    %v119 = vpop.f32.mrb[0].mxu0
    %120 = vmatprep.mubr.f32.mxu0 0.0
    %121 = vmatmul.mubr.f32.gmra.mrb[0].mxu0 %v49
    %v122 = vpop.f32.mrb[0].mxu0
    %v123 = vadd.f32 0.0, %v122
    %v124 = vpop.f32.mrb[0].mxu0
    %125 = vdwg.mxu0
    %vm126 = vcmask 523264
    %127 = vst.msk [vmem:[#allocation7] sm:$0xff] %vm126, %v118
    %128 = vst.msk [vmem:[#allocation7 + $0x8] sm:$0xff] %vm126, %v123
    // Predicated region
    $region18: #{tpu_custom_call.1} parent=1 // pred_check
      _
    $region19: #{tpu_custom_call.1} parent=1 // pred_check_branch
      %130 = sbr.rel (0) target = $region21
    $region20: #{tpu_custom_call.1} parent=1 // pred_region
      %s132 = ssub.s32 256, 256
      %133 = vsyncadd [#allocation4], %s132
      %s134 = sshll.u32 [#allocation7], 4
      %s135 = int_to_ptr.vmem [resolvable:$true] %s134
      %140 = dma.vmem_to_hbm [thread:$0]  %s135, 256, %s2, [#allocation4], 128, 128, 8
    $region21: #{tpu_custom_call.1} parent=1 // pred_fallthru
      _
    // Predicated region
    $region22: #{tpu_custom_call.1} parent=1 // pred_check
      _
    $region23: #{tpu_custom_call.1} parent=1 // pred_check_branch
      %142 = sbr.rel (0) target = $region25
    $region24: #{tpu_custom_call.1} parent=1 // pred_region
      %143 = dma.done [#allocation4], 256
    $region25: #{tpu_custom_call.1} parent=1 // pred_fallthru
      _
    %144 = vsyncpa [#allocation3], 1
    %145 = vsyncpa [#allocation6], 1
    %146 = vsyncpa [#allocation4], 1

</llo_original>
